<compile_context>
chip_gen: v7x
topology: tpu7x:2x2x1
jax: 0.10.0
libtpu: 0.0.40
codegen_flags: <defaults>
</compile_context>

<pallas_src>
import jax
import jax.numpy as jnp
from jax import lax
from jax.experimental import pallas as pl
from jax.experimental.pallas import tpu as pltpu

NUM_EXPERTS = 8
TOP_K = 2


def _round_up(n, m):
    return ((n + m - 1) // m) * m


# --------------------------------------------------------------------------------------
# Router kernel: gate matmul + softmax + top-2 + renormalize.
# Computed and stored directly in (E, t_tile) layout: the lane-dense t_tile last dim gives
# unmasked vector stores, and the wrapper reshape (E, T) -> (E, T, 1) is free (no transpose).
# --------------------------------------------------------------------------------------
def _router_kernel(x_ref, gw_ref, gb_ref, rw_ref):
    # logits[e, t] = sum_h gate_w[e, h] * x[t, h] + gate_b[e]
    logits = lax.dot_general(
        gw_ref[...], x_ref[...],
        dimension_numbers=(((1,), (1,)), ((), ())),        # contract hidden; no transpose
        preferred_element_type=jnp.float32,
    ) + gb_ref[...].astype(jnp.float32)                     # (E, 1) broadcast along lanes

    m = jnp.max(logits, axis=0, keepdims=True)
    p = jnp.exp(logits - m)
    probs = p / jnp.sum(p, axis=0, keepdims=True)           # softmax over experts, (E, t_tile)

    E = probs.shape[0]
    idx = lax.broadcasted_iota(jnp.int32, probs.shape, 0)
    top1_v = jnp.max(probs, axis=0, keepdims=True)
    top1_i = jnp.min(jnp.where(probs == top1_v, idx, E), axis=0, keepdims=True)
    masked = jnp.where(idx == top1_i, -jnp.inf, probs)
    top2_v = jnp.max(masked, axis=0, keepdims=True)
    top2_i = jnp.min(jnp.where(masked == top2_v, idx, E), axis=0, keepdims=True)

    denom = top1_v + top2_v                                  # routing_weights /= sum(top-2)
    rw_ref[...] = (jnp.where(idx == top1_i, top1_v / denom, 0.0)
                   + jnp.where(idx == top2_i, top2_v / denom, 0.0))


# --------------------------------------------------------------------------------------
# Expert kernel: per-(token-tile, expert, I-tile) SiLU-gated MLP with f32 accumulation
# --------------------------------------------------------------------------------------
def _expert_kernel(x_ref, rw_ref, w1_ref, w3_ref, w2_ref, out_ref, acc_ref):
    e = pl.program_id(1)
    i = pl.program_id(2)
    first = jnp.logical_and(e == 0, i == 0)
    last = jnp.logical_and(e == pl.num_programs(1) - 1, i == pl.num_programs(2) - 1)

    x = x_ref[...]                                           # (t_tile, H), native dtype
    # Up / gate projections: contract hidden (last axis of both operands; no transpose).
    h1 = lax.dot_general(x, w1_ref[...], dimension_numbers=(((1,), (1,)), ((), ())),
                         preferred_element_type=jnp.float32)
    h3 = lax.dot_general(x, w3_ref[...], dimension_numbers=(((1,), (1,)), ((), ())),
                         preferred_element_type=jnp.float32)
    # SiLU gating in f32, scaled by the (zero for unselected tokens) routing weight column.
    h = (h1 * jax.nn.sigmoid(h1)) * h3 * rw_ref[...]         # (t_tile, i_tile) * (t_tile, 1)
    # Down projection: w2 was pre-transposed to (I, H), so this is a canonical (K, N) RHS.
    y = lax.dot_general(h.astype(x.dtype), w2_ref[...],
                        dimension_numbers=(((1,), (0,)), ((), ())),
                        preferred_element_type=jnp.float32)

    @pl.when(first)
    def _():
        acc_ref[...] = y                                     # first step writes (no zero-init)

    @pl.when(jnp.logical_not(first))
    def _():
        acc_ref[...] += y

    @pl.when(last)
    def _():
        out_ref[...] = acc_ref[...].astype(out_ref.dtype)    # single lane-dense writeback


# --------------------------------------------------------------------------------------
# Generation-specific tiling + scoped-VMEM budget
# --------------------------------------------------------------------------------------
def _select_tiles(T, I):
    try:
        kind = jax.devices()[0].device_kind.lower()
    except Exception:
        kind = ""
    if "v7" in kind:
        # 64 MiB physical VMEM: keep the working set well under it; i_tile=256 still matches
        # the 256-wide MXU on the up-proj N dim / down-proj K dim.
        t_tile, i_tile, vmem_cap = 512, 256, 52 * 1024 * 1024
        # Guarantee >= 2 token tiles so the "parallel" token axis shards across both TCs.
        if T >= 16:
            t_tile = min(t_tile, _round_up(-(-T // 2), 8))
    elif "v6" in kind:
        # Weight-streaming bound at t_tile=256; t_tile=512 moves toward the MXU roofline.
        t_tile, i_tile, vmem_cap = 512, 512, 64 * 1024 * 1024
    else:
        # v5e (and unknown chips): 197 TF/s vs ~0.82 TB/s -> t_tile=256 is already near balanced.
        t_tile, i_tile, vmem_cap = 256, 512, 48 * 1024 * 1024
    return t_tile, i_tile, vmem_cap


def _vmem_limit_bytes(t_tile, i_tile, H, x_bytes, w_bytes, cap):
    working_set = (t_tile * H * x_bytes                      # x tile (Buffered(1))
                   + t_tile * 4                              # routing column (f32)
                   + 2 * 3 * i_tile * H * w_bytes            # w1, w3, w2 tiles, double-buffered
                   + 2 * t_tile * H * x_bytes                # output tile, double-buffered
                   + t_tile * H * 4)                         # f32 accumulator scratch
    # 50% headroom for Mosaic internal scratch / retiling, clamped to the per-chip cap.
    return int(min(cap, max(working_set + working_set // 2, 32 * 1024 * 1024)))


def _expert_call(x, rw_et1, w1, w3, w2_t, *, t_tile, i_tile, vmem_limit, single_buffer_x):
    T, H = x.shape
    E, I, _ = w1.shape
    n_t = pl.cdiv(T, t_tile)
    resident_kwargs = dict(pipeline_mode=pl.Buffered(1)) if single_buffer_x else {}

    cost = pl.CostEstimate(
        flops=6 * T * E * I * H,                             # three matmuls per expert
        transcendentals=T * E * I,                           # sigmoid in the SiLU gate
        bytes_accessed=(n_t * 3 * E * I * H * w1.dtype.itemsize   # weights streamed per token tile
                        + 2 * T * H * x.dtype.itemsize            # x read + out write
                        + E * T * 4),                             # routing weights
    )

    return pl.pallas_call(
        _expert_kernel,
        out_shape=jax.ShapeDtypeStruct((T, H), x.dtype),
        grid_spec=pltpu.PrefetchScalarGridSpec(
            num_scalar_prefetch=0,
            grid=(n_t, E, pl.cdiv(I, i_tile)),
            in_specs=[
                # x tile: resident across the (expert, I-tile) reduction axes.
                pl.BlockSpec((t_tile, H), lambda t, e, i: (t, 0), **resident_kwargs),
                # Routing-weight column of expert e for this token tile (also resident).
                pl.BlockSpec((None, t_tile, 1), lambda t, e, i: (e, t, 0), **resident_kwargs),
                # Expert weight tiles streamed along I; all (i_tile, H): contiguous DMA rows.
                pl.BlockSpec((None, i_tile, H), lambda t, e, i: (e, i, 0)),   # w1
                pl.BlockSpec((None, i_tile, H), lambda t, e, i: (e, i, 0)),   # w3
                pl.BlockSpec((None, i_tile, H), lambda t, e, i: (e, i, 0)),   # w2 (pre-transposed)
            ],
            out_specs=pl.BlockSpec((t_tile, H), lambda t, e, i: (t, 0)),
            scratch_shapes=[pltpu.VMEM((t_tile, H), jnp.float32)],            # f32 accumulator
        ),
        compiler_params=pltpu.CompilerParams(
            dimension_semantics=("parallel", "arbitrary", "arbitrary"),       # token axis -> megacore
            vmem_limit_bytes=vmem_limit,
        ),
        cost_estimate=cost,
    )(x, rw_et1, w1, w3, w2_t)


# --------------------------------------------------------------------------------------
# Wrapper
# --------------------------------------------------------------------------------------
def mixtral_moe_block(x, gate_w, gate_b, w1, w3, w2, *, t_tile=None, i_tile=None):
    """x: [T, H] tokens; gate_w: [E, H]; gate_b: [E]; w1, w3: [E, I, H]; w2: [E, H, I]
    (PyTorch nn.Linear weight layouts)."""
    T, H = x.shape
    E, I, _ = w1.shape

    auto_t, auto_i, vmem_cap = _select_tiles(T, I)
    t_tile = min(t_tile if t_tile is not None else auto_t, T)
    i_tile = min(i_tile if i_tile is not None else auto_i, I)
    vmem_limit = _vmem_limit_bytes(t_tile, i_tile, H, x.dtype.itemsize, w1.dtype.itemsize,
                                   vmem_cap)

    # Router: tiny separate pallas_call (kept out of the hot expert loop), emits (E, T).
    dense_rw = pl.pallas_call(
        _router_kernel,
        out_shape=jax.ShapeDtypeStruct((E, T), jnp.float32),
        grid_spec=pltpu.PrefetchScalarGridSpec(
            num_scalar_prefetch=0,
            grid=(pl.cdiv(T, t_tile),),
            in_specs=[
                pl.BlockSpec((t_tile, H), lambda t: (t, 0)),
                pl.BlockSpec((E, H), lambda t: (0, 0)),
                pl.BlockSpec((E, 1), lambda t: (0, 0)),
            ],
            out_specs=pl.BlockSpec((E, t_tile), lambda t: (0, t)),     # lane-dense last dim
        ),
    )(x, gate_w, gate_b.reshape(E, 1))

    # Free reshape (no transpose): the expert kernel reads a (t_tile, 1) column per expert.
    rw_et1 = dense_rw.reshape(E, T, 1)

    # Pre-transpose w2 once to (E, I, H): contiguous (i_tile, H) DMA rows + canonical MXU RHS.
    # In production, store the down-projection weights in this layout to avoid the per-call op.
    w2_t = jnp.swapaxes(w2, 1, 2)

    call_kwargs = dict(t_tile=t_tile, i_tile=i_tile, vmem_limit=vmem_limit)
    try:
        return _expert_call(x, rw_et1, w1, w3, w2_t, single_buffer_x=True, **call_kwargs)
    except Exception:
        # Fallback for JAX versions that reject BlockSpec(pipeline_mode=pl.Buffered(1)).
        return _expert_call(x, rw_et1, w1, w3, w2_t, single_buffer_x=False, **call_kwargs)


# --------------------------------------------------------------------------------------
# Plain-JAX reference of the same forward pass
# --------------------------------------------------------------------------------------
def reference_moe(x, gate_w, gate_b, w1, w3, w2):
    logits = x @ gate_w.T + gate_b
    probs = jax.nn.softmax(logits, axis=-1)
    top_v, top_i = jax.lax.top_k(probs, TOP_K)
    top_v = top_v / jnp.sum(top_v, axis=-1, keepdims=True)
    out = jnp.zeros_like(x)
    for e in range(NUM_EXPERTS):
        h1 = x @ w1[e].T
        h3 = x @ w3[e].T
        y = (jax.nn.silu(h1) * h3) @ w2[e].T
        w_e = jnp.sum(jnp.where(top_i == e, top_v, 0.0), axis=-1, keepdims=True)
        out = out + y * w_e
    return out


if __name__ == "__main__":
    batch, seq, hidden, inter = 2, 4, 32, 64
    E = NUM_EXPERTS

    key = jax.random.PRNGKey(0)
    kx, kg, kb, k1, k3, k2 = jax.random.split(key, 6)

    x_bsd = jax.random.normal(kx, (batch, seq, hidden), dtype=jnp.float32)
    x = x_bsd.reshape(batch * seq, hidden)                                 # [T, H] token layout

    # Spec uses nn.Linear(hidden, 8) with default bias (real Mixtral routers are bias-free).
    gate_w = 0.1 * jax.random.normal(kg, (E, hidden), dtype=jnp.float32)   # nn.Linear(H, 8).weight
    gate_b = 0.1 * jax.random.normal(kb, (E,), dtype=jnp.float32)          # nn.Linear(H, 8).bias
    # TODO(synk): MLP(config) is unspecified in the snippet; using the Mixtral SiLU-gated MLP
    # (w1, w2, w3, no bias).
    w1 = 0.1 * jax.random.normal(k1, (E, inter, hidden), dtype=jnp.float32)
    w3 = 0.1 * jax.random.normal(k3, (E, inter, hidden), dtype=jnp.float32)
    w2 = 0.1 * jax.random.normal(k2, (E, hidden, inter), dtype=jnp.float32)

    out = mixtral_moe_block(x, gate_w, gate_b, w1, w3, w2)
    out = jax.block_until_ready(out)

    ref = reference_moe(x, gate_w, gate_b, w1, w3, w2)
    assert out.shape == (batch * seq, hidden)
    assert jnp.allclose(out, ref, rtol=1e-5, atol=1e-5), "mismatch vs. reference"

    print("KERNEL_OK")
</pallas_src>

<mosaic_0001>
module attributes {stable_mosaic.version = 11 : i64} {
  func.func @_router_kernel(%arg0: i32, %arg1: memref<8x32xf32, #tpu.memory_space<vmem>>, %arg2: memref<8x32xf32, #tpu.memory_space<vmem>>, %arg3: memref<8x1xf32, #tpu.memory_space<vmem>>, %arg4: memref<8x8xf32, #tpu.memory_space<vmem>>) attributes {dimension_semantics = [#tpu.dimension_semantics<arbitrary>], iteration_bounds = array<i64: 1>, scalar_prefetch = 0 : i64, scratch_operands = 0 : i64, tpu.core_type = #tpu.core_type<tc>, window_params = [{transform_indices = @transform_0, window_bounds = array<i64: 8, 32>}, {pipeline_mode = #tpu.pipeline_mode<synchronous>, transform_indices = @transform_1, window_bounds = array<i64: 8, 32>}, {pipeline_mode = #tpu.pipeline_mode<synchronous>, transform_indices = @transform_2, window_bounds = array<i64: 8, 1>}, {transform_indices = @transform_3, window_bounds = array<i64: 8, 8>}]} {
    %c0 = arith.constant 0 : index
    %c0_0 = arith.constant 0 : index
    %0 = vector.load %arg2[%c0, %c0_0] : memref<8x32xf32, #tpu.memory_space<vmem>>, vector<8x32xf32>
    %c0_1 = arith.constant 0 : index
    %c0_2 = arith.constant 0 : index
    %1 = vector.load %arg1[%c0_1, %c0_2] : memref<8x32xf32, #tpu.memory_space<vmem>>, vector<8x32xf32>
    %cst = arith.constant dense<0.000000e+00> : vector<8x8xf32>
    %2 = tpu.matmul %0, %1, %cst {dimension_numbers = #tpu.dot_dimension_numbers<[1], [1], [0], [0], [0, 0, 1, 0], [], []>} : vector<8x32xf32>, vector<8x32xf32>, vector<8x8xf32> -> vector<8x8xf32>
    %c0_3 = arith.constant 0 : index
    %c0_4 = arith.constant 0 : index
    %3 = vector.load %arg3[%c0_3, %c0_4] : memref<8x1xf32, #tpu.memory_space<vmem>>, vector<8x1xf32>
    %4 = vector.broadcast %3 : vector<8x1xf32> to vector<8x8xf32>
    %5 = arith.addf %2, %4 : vector<8x8xf32>
    %cst_5 = arith.constant dense<0xFF800000> : vector<8xf32>
    %6 = vector.multi_reduction <maximumf>, %5, %cst_5 [0] : vector<8x8xf32> to vector<8xf32>
    %7 = vector.shape_cast %6 : vector<8xf32> to vector<1x8xf32>
    %8 = vector.broadcast %7 : vector<1x8xf32> to vector<8x8xf32>
    %9 = arith.subf %5, %8 : vector<8x8xf32>
    %10 = math.exp %9 : vector<8x8xf32>
    %cst_6 = arith.constant dense<0.000000e+00> : vector<8xf32>
    %11 = vector.multi_reduction <add>, %10, %cst_6 [0] : vector<8x8xf32> to vector<8xf32>
    %12 = vector.shape_cast %11 : vector<8xf32> to vector<1x8xf32>
    %13 = vector.broadcast %12 : vector<1x8xf32> to vector<8x8xf32>
    %14 = arith.divf %10, %13 : vector<8x8xf32>
    %15 = tpu.iota {dimensions = array<i32: 0>} : vector<8x8xi32>
    %cst_7 = arith.constant dense<0xFF800000> : vector<8xf32>
    %16 = vector.multi_reduction <maximumf>, %14, %cst_7 [0] : vector<8x8xf32> to vector<8xf32>
    %17 = vector.shape_cast %16 : vector<8xf32> to vector<1x8xf32>
    %18 = vector.broadcast %17 : vector<1x8xf32> to vector<8x8xf32>
    %19 = arith.cmpf oeq, %14, %18 : vector<8x8xf32>
    %c8_i32 = arith.constant 8 : i32
    %20 = vector.broadcast %c8_i32 : i32 to vector<8x8xi32>
    %21 = arith.select %19, %15, %20 : vector<8x8xi1>, vector<8x8xi32>
    %cst_8 = arith.constant dense<2147483647> : vector<8xi32>
    %22 = vector.multi_reduction <minsi>, %21, %cst_8 [0] : vector<8x8xi32> to vector<8xi32>
    %23 = vector.shape_cast %22 : vector<8xi32> to vector<1x8xi32>
    %24 = vector.broadcast %23 : vector<1x8xi32> to vector<8x8xi32>
    %25 = arith.cmpi eq, %15, %24 : vector<8x8xi32>
    %cst_9 = arith.constant 0xFF800000 : f32
    %26 = vector.broadcast %cst_9 : f32 to vector<8x8xf32>
    %27 = arith.select %25, %26, %14 : vector<8x8xi1>, vector<8x8xf32>
    %cst_10 = arith.constant dense<0xFF800000> : vector<8xf32>
    %28 = vector.multi_reduction <maximumf>, %27, %cst_10 [0] : vector<8x8xf32> to vector<8xf32>
    %29 = vector.shape_cast %28 : vector<8xf32> to vector<1x8xf32>
    %30 = vector.broadcast %29 : vector<1x8xf32> to vector<8x8xf32>
    %31 = arith.cmpf oeq, %27, %30 : vector<8x8xf32>
    %c8_i32_11 = arith.constant 8 : i32
    %32 = vector.broadcast %c8_i32_11 : i32 to vector<8x8xi32>
    %33 = arith.select %31, %15, %32 : vector<8x8xi1>, vector<8x8xi32>
    %cst_12 = arith.constant dense<2147483647> : vector<8xi32>
    %34 = vector.multi_reduction <minsi>, %33, %cst_12 [0] : vector<8x8xi32> to vector<8xi32>
    %35 = vector.shape_cast %34 : vector<8xi32> to vector<1x8xi32>
    %36 = arith.addf %17, %29 : vector<1x8xf32>
    %37 = vector.broadcast %23 : vector<1x8xi32> to vector<8x8xi32>
    %38 = arith.cmpi eq, %15, %37 : vector<8x8xi32>
    %39 = arith.divf %17, %36 : vector<1x8xf32>
    %cst_13 = arith.constant 0.000000e+00 : f32
    %40 = vector.shape_cast %39 : vector<1x8xf32> to vector<1x8xf32>
    %41 = vector.broadcast %40 : vector<1x8xf32> to vector<8x8xf32>
    %42 = vector.broadcast %cst_13 : f32 to vector<8x8xf32>
    %43 = arith.select %38, %41, %42 : vector<8x8xi1>, vector<8x8xf32>
    %44 = vector.broadcast %35 : vector<1x8xi32> to vector<8x8xi32>
    %45 = arith.cmpi eq, %15, %44 : vector<8x8xi32>
    %46 = arith.divf %29, %36 : vector<1x8xf32>
    %cst_14 = arith.constant 0.000000e+00 : f32
    %47 = vector.shape_cast %46 : vector<1x8xf32> to vector<1x8xf32>
    %48 = vector.broadcast %47 : vector<1x8xf32> to vector<8x8xf32>
    %49 = vector.broadcast %cst_14 : f32 to vector<8x8xf32>
    %50 = arith.select %45, %48, %49 : vector<8x8xi1>, vector<8x8xf32>
    %51 = arith.addf %43, %50 : vector<8x8xf32>
    %c0_15 = arith.constant 0 : index
    %c0_16 = arith.constant 0 : index
    %52 = vector.load %arg4[%c0_15, %c0_16] : memref<8x8xf32, #tpu.memory_space<vmem>>, vector<8x8xf32>
    tpu.vector_store %arg4[%c0_15, %c0_16], %51 {strides = array<i32>} : memref<8x8xf32, #tpu.memory_space<vmem>>, vector<8x8xf32>,
    return
  }
  func.func @transform_0(%arg0: i32) -> (i32, i32) {
    %c0_i32 = arith.constant 0 : i32
    %c0_i32_0 = arith.constant 0 : i32
    return %arg0, %c0_i32 : i32, i32
  }
  func.func @transform_1(%arg0: i32) -> (i32, i32) {
    %c0_i32 = arith.constant 0 : i32
    %c0_i32_0 = arith.constant 0 : i32
    %c0_i32_1 = arith.constant 0 : i32
    return %c0_i32, %c0_i32_0 : i32, i32
  }
  func.func @transform_2(%arg0: i32) -> (i32, i32) {
    %c0_i32 = arith.constant 0 : i32
    %c0_i32_0 = arith.constant 0 : i32
    %c0_i32_1 = arith.constant 0 : i32
    return %c0_i32, %c0_i32_0 : i32, i32
  }
  func.func @transform_3(%arg0: i32) -> (i32, i32) {
    %c0_i32 = arith.constant 0 : i32
    %c0_i32_0 = arith.constant 0 : i32
    return %c0_i32, %arg0 : i32, i32
  }
}

</mosaic_0001>

<llo_original>
// kernel: tpu_custom_call.1
$region0: #{tpu_custom_call.1}
  #allocation0 [shape = 'u32[]', space=smem, size = 0x4, offset = 0x4, fixed_abs, tag = 'smem constant byte address 0x4 - core index']
  #allocation1 [shape = 'u32[144,128]{1,0:T(1,128)}', space=vmem, size = 0x12000, scoped, tag = 'internal scratch']
  %s0 = inlined_call_operand.vmem [shape: f32[8,32], index: 0, kind: input, shape index: {}]
  %s1 = inlined_call_operand.hbm [shape: f32[8,32], index: 1, kind: input, shape index: {}]
  %s2 = inlined_call_operand.vmem [shape: f32[8,1], index: 2, kind: input, shape index: {}]
  %s3 = inlined_call_operand.hbm [shape: f32[8,8], index: 3, kind: output, shape index: {}]
  %s4 = sld [smem:[#allocation0]]
  $region26: #{tpu_custom_call.1} parent=0
    _
  %s6 = ssub.s32 1, %s4
  %s7 = scalar_select 0, %s6, %s4
  $region1: #{tpu_custom_call.1} parent=0
    #allocation2 [shape = 'u8[4096]{0}', space=vmem, size = 0x1000, scoped, tag = 'input window, operand 1, single buffered']
    #allocation3 [shape = 's32[1]{0}', space=sflag, size = 0x4, scoped, tag = 'scoped memory for tpu_custom_call.1']
    #allocation4 [shape = 's32[1]{0}', space=sflag, size = 0x4, scoped, tag = 'scoped memory for tpu_custom_call.1']
    #allocation5 [shape = 'u8[4096]{0}', space=vmem, size = 0x1000, scoped, tag = 'output window, operand 0, single buffered']
    %8 = vsyncpa [#allocation3], 0
    %9 = vsyncpa [#allocation4], 0
    // Predicated region
    $region2: #{tpu_custom_call.1} parent=1 // pred_check
      _
    $region3: #{tpu_custom_call.1} parent=1 // pred_check_branch
      %11 = sbr.rel (0) target = $region5
    $region4: #{tpu_custom_call.1} parent=1 // pred_region
      _
    $region5: #{tpu_custom_call.1} parent=1 // pred_fallthru
      _
    // Predicated region
    $region6: #{tpu_custom_call.1} parent=1 // pred_check
      _
    $region7: #{tpu_custom_call.1} parent=1 // pred_check_branch
      %13 = sbr.rel (0) target = $region9
    $region8: #{tpu_custom_call.1} parent=1 // pred_region
      %s15 = ssub.s32 128, 128
      %16 = vsyncadd [#allocation3], %s15
      %s18 = sshll.u32 [#allocation2], 4
      %s19 = int_to_ptr.vmem [resolvable:$true] %s18
      %21 = dma.hbm_to_vmem [thread:$0]  %s1, 128, %s19, [#allocation3]
    $region9: #{tpu_custom_call.1} parent=1 // pred_fallthru
      _
    // Predicated region
    $region10: #{tpu_custom_call.1} parent=1 // pred_check
      _
    $region11: #{tpu_custom_call.1} parent=1 // pred_check_branch
      %23 = sbr.rel (0) target = $region13
    $region12: #{tpu_custom_call.1} parent=1 // pred_region
      _
    $region13: #{tpu_custom_call.1} parent=1 // pred_fallthru
      _
    // Predicated region
    $region14: #{tpu_custom_call.1} parent=1 // pred_check
      _
    $region15: #{tpu_custom_call.1} parent=1 // pred_check_branch
      %25 = sbr.rel (0) target = $region17
    $region16: #{tpu_custom_call.1} parent=1 // pred_region
      %26 = dma.done [#allocation3], 128
    $region17: #{tpu_custom_call.1} parent=1 // pred_fallthru
      _
    %v27 = vld [vmem:[#allocation2] sm:$0xff]
    %v28 = vld [vmem:[%s0] sm:$0xff]
    %v29 = vld [vmem:[%s2] sm:$0xff]
    %31 = vset.pattern.permute.xlu0 0
    %32 = vperm.xlu0 %31, %v29
    %v33 = vpop.permute.xlu0 %32
    %vm35 = vcmask 261120
    %v37 = vsel %vm35, %v27, 0
    %v40 = vsel %vm35, %v28, 0
    %42 = vmatprep.subr.mxu0 0.0
    %43 = vmatpush1.xpose.msra.mxu0 %v40
    %44 = vmatprep.subr.mxu0 0.0
    %45 = vmatpush1.xpose.msra.mxu0 0.0
    %46 = vmatprep.subr.mxu0 0.0
    %47 = vmatpush1.xpose.msra.mxu0 0.0
    %48 = vmatprep.subr.mxu0 0.0
    %49 = vmatpush1.xpose.msra.mxu0 0.0
    %50 = vmatprep.subr.mxu0 0.0
    %51 = vmatpush1.xpose.msra.mxu0 0.0
    %52 = vmatprep.subr.mxu0 0.0
    %53 = vmatpush1.xpose.msra.mxu0 0.0
    %54 = vmatprep.subr.mxu0 0.0
    %55 = vmatpush1.xpose.msra.mxu0 0.0
    %56 = vmatprep.subr.mxu0 0.0
    %57 = vmatpush1.xpose.msra.mxu0 0.0
    %58 = vmatprep.subr.mxu0 0.0
    %59 = vmatpush1.xpose.msra.mxu0 0.0
    %60 = vmatprep.subr.mxu0 0.0
    %61 = vmatpush1.xpose.msra.mxu0 0.0
    %62 = vmatprep.subr.mxu0 0.0
    %63 = vmatpush1.xpose.msra.mxu0 0.0
    %64 = vmatprep.subr.mxu0 0.0
    %65 = vmatpush1.xpose.msra.mxu0 0.0
    %66 = vmatprep.subr.mxu0 0.0
    %67 = vmatpush1.xpose.msra.mxu0 0.0
    %68 = vmatprep.subr.mxu0 0.0
    %69 = vmatpush1.xpose.msra.mxu0 0.0
    %70 = vmatprep.subr.mxu0 0.0
    %71 = vmatpush1.xpose.msra.mxu0 0.0
    %72 = vmatprep.subr.mxu0 0.0
    %73 = vmatpush1.xpose.msra.mxu0 0.0
    %74 = vmatprep.subr.mxu0 0.0
    %75 = vmatpush1.xpose.msra.mxu0 0.0
    %76 = vmatprep.subr.mxu0 0.0
    %77 = vmatpush1.xpose.msra.mxu0 0.0
    %78 = vmatprep.subr.mxu0 0.0
    %79 = vmatpush1.xpose.msra.mxu0 0.0
    %80 = vmatprep.subr.mxu0 0.0
    %81 = vmatpush1.xpose.msra.mxu0 0.0
    %82 = vmatprep.subr.mxu0 0.0
    %83 = vmatpush1.xpose.msra.mxu0 0.0
    %84 = vmatprep.subr.mxu0 0.0
    %85 = vmatpush1.xpose.msra.mxu0 0.0
    %86 = vmatprep.subr.mxu0 0.0
    %87 = vmatpush1.xpose.msra.mxu0 0.0
    %88 = vmatprep.subr.mxu0 0.0
    %89 = vmatpush1.xpose.msra.mxu0 0.0
    %90 = vmatprep.subr.mxu0 0.0
    %91 = vmatpush1.xpose.msra.mxu0 0.0
    %92 = vmatprep.subr.mxu0 0.0
    %93 = vmatpush1.xpose.msra.mxu0 0.0
    %94 = vmatprep.subr.mxu0 0.0
    %95 = vmatpush1.xpose.msra.mxu0 0.0
    %96 = vmatprep.subr.mxu0 0.0
    %97 = vmatpush1.xpose.msra.mxu0 0.0
    %98 = vmatprep.subr.mxu0 0.0
    %99 = vmatpush1.xpose.msra.mxu0 0.0
    %100 = vmatprep.subr.mxu0 0.0
    %101 = vmatpush1.xpose.msra.mxu0 0.0
    %102 = vmatprep.subr.mxu0 0.0
    %103 = vmatpush1.xpose.msra.mxu0 0.0
    %104 = vmatprep.subr.mxu0 0.0
    %105 = vmatpush1.xpose.msra.mxu0 0.0
    %106 = vmatprep.mubr.f32.mxu0 0.0
    %107 = vmatmul.mubr.f32.gmra.mrb[0].mxu0 %v37
    %v108 = vpop.f32.mrb[0].mxu0
    %v109 = vadd.f32 %v33, %v108
    %v110 = vpop.f32.mrb[0].mxu0
    %111 = vdwg.mxu0
    %vm112 = vcmask 64512
    %v113 = vsel %vm112, %v109, -inf
    %v114 = vrot.slane %v113, 4
    %v115 = vmax.f32 %v113, %v114
    %v116 = vrot.slane %v115, 2
    %v117 = vmax.f32 %v115, %v116
    %v118 = vrot.slane %v117, 1
    %v119 = vmax.f32 %v117, %v118
    %v120 = vsub.f32 %v109, %v119
    %v121 = vmul.f32 %v120, 1.442695
    %v122 = vpow.pop %v121
    %v123 = vsel %vm112, %v122, 0.0
    %v124 = vrot.slane %v123, 4
    %v125 = vadd.f32 %v123, %v124
    %v126 = vrot.slane %v125, 2
    %v127 = vadd.f32 %v125, %v126
    %v128 = vrot.slane %v127, 1
    %v129 = vadd.f32 %v127, %v128
    %v130 = vrcp.pop %v129
    %v131 = vmul.f32 %v122, %v130
    %v132 = vlaneseq
    %v133 = vshrl.u32 %v132, 7
    %v134 = vsel %vm112, %v131, -inf
    %v135 = vrot.slane %v134, 4
    %v136 = vmax.f32 %v134, %v135
    %v137 = vrot.slane %v136, 2
    %v138 = vmax.f32 %v136, %v137
    %v139 = vrot.slane %v138, 1
    %v140 = vmax.f32 %v138, %v139
    %vm141 = vcmp.eq.f32.partialorder %v131, %v140
    %v142 = vsel %vm141, %v133, 8
    %v143 = vsel %vm112, %v142, 2147483647
    %v144 = vrot.slane %v143, 4
    %vm145 = vcmp.lt.s32.totalorder %v143, %v144
    %v146 = vsel %vm145, %v143, %v144
    %v147 = vrot.slane %v146, 2
    %vm148 = vcmp.lt.s32.totalorder %v146, %v147
    %v149 = vsel %vm148, %v146, %v147
    %v150 = vrot.slane %v149, 1
    %vm151 = vcmp.lt.s32.totalorder %v149, %v150
    %v152 = vsel %vm151, %v149, %v150
    %vm153 = vcmp.eq.s32.totalorder %v133, %v152
    %v154 = vsel %vm153, -inf, %v131
    %v155 = vsel %vm112, %v154, -inf
    %v156 = vrot.slane %v155, 4
    %v157 = vmax.f32 %v155, %v156
    %v158 = vrot.slane %v157, 2
    %v159 = vmax.f32 %v157, %v158
    %v160 = vrot.slane %v159, 1
    %v161 = vmax.f32 %v159, %v160
    %vm162 = vcmp.eq.f32.partialorder %v154, %v161
    %v163 = vsel %vm162, %v133, 8
    %v164 = vsel %vm112, %v163, 2147483647
    %v165 = vrot.slane %v164, 4
    %vm166 = vcmp.lt.s32.totalorder %v164, %v165
    %v167 = vsel %vm166, %v164, %v165
    %v168 = vrot.slane %v167, 2
    %vm169 = vcmp.lt.s32.totalorder %v167, %v168
    %v170 = vsel %vm169, %v167, %v168
    %v171 = vrot.slane %v170, 1
    %vm172 = vcmp.lt.s32.totalorder %v170, %v171
    %v173 = vsel %vm172, %v170, %v171
    %v174 = vadd.f32 %v140, %v161
    %v175 = vrcp.pop %v174
    %v176 = vmul.f32 %v140, %v175
    %v177 = vsel %vm153, %v176, 0.0
    %vm178 = vcmp.eq.s32.totalorder %v133, %v173
    %v179 = vmul.f32 %v161, %v175
    %v180 = vsel %vm178, %v179, 0.0
    %v181 = vadd.f32 %v177, %v180
    %182 = vst.msk [vmem:[#allocation5] sm:$0xff] %vm112, %v181
    // Predicated region
    $region18: #{tpu_custom_call.1} parent=1 // pred_check
      _
    $region19: #{tpu_custom_call.1} parent=1 // pred_check_branch
      %184 = sbr.rel (0) target = $region21
    $region20: #{tpu_custom_call.1} parent=1 // pred_region
      %s186 = ssub.s32 128, 128
      %187 = vsyncadd [#allocation4], %s186
      %s189 = sshll.u32 [#allocation5], 4
      %s190 = int_to_ptr.vmem [resolvable:$true] %s189
      %192 = dma.vmem_to_hbm [thread:$0]  %s190, 128, %s3, [#allocation4]
    $region21: #{tpu_custom_call.1} parent=1 // pred_fallthru
      _
    // Predicated region
    $region22: #{tpu_custom_call.1} parent=1 // pred_check
      _
    $region23: #{tpu_custom_call.1} parent=1 // pred_check_branch
      %194 = sbr.rel (0) target = $region25
    $region24: #{tpu_custom_call.1} parent=1 // pred_region
      %195 = dma.done [#allocation4], 128
    $region25: #{tpu_custom_call.1} parent=1 // pred_fallthru
      _
    %196 = vsyncpa [#allocation3], 1
    %197 = vsyncpa [#allocation4], 1

</llo_original>
